<compile_context>
chip_gen: v5e
topology: v5e:2x2
jax: 0.10.0
libtpu: 0.0.40
codegen_flags: <defaults>
</compile_context>

<pallas_src>
import functools

import jax
import jax.numpy as jnp
from jax.experimental import pallas as pl
from jax.experimental.pallas import tpu as pltpu

LANES = 128
SUBLANES = 8
CHUNK = SUBLANES * LANES          # 1024 elements: minimum aligned unit
SUB_ROWS = 512                    # rows per in-kernel fold sub-tile (256 KiB f32)


def _rmse_partial_kernel(p_ref, t_ref, o_ref, *, valid_rows, needs_mask, sub):
    """Per-grid-block partial sum of squared differences.

    p_ref/t_ref: (tm, 128) input tiles (any float dtype; upcast after load).
    o_ref:       (8, 128) f32 partial sum; one independent block per grid step.
    """
    i = pl.program_id(0)
    tm = p_ref.shape[0]
    n_sub = tm // sub

    def fold(j, acc):
        start = j * sub
        if not isinstance(start, int):
            start = pl.multiple_of(start, sub)   # aligned-load hint for the DMA'd tile
        p = p_ref[pl.ds(start, sub), :].astype(jnp.float32)
        t = t_ref[pl.ds(start, sub), :].astype(jnp.float32)
        d = p - t
        sq = d * d
        if needs_mask:
            # Only the last (ragged) grid block extends past the array; rows at or
            # beyond `valid_rows` hold undefined data in the edge-block VMEM buffer,
            # so zero them before accumulating.
            row = jax.lax.broadcasted_iota(jnp.int32, sq.shape, 0) + (i * tm + start)
            sq = jnp.where(row < valid_rows, sq, 0.0)
        # (sub, 128) -> (8, 128): VPU-only vreg adds; no XLU work in the hot loop.
        return acc + sq.reshape(sub // SUBLANES, SUBLANES, LANES).sum(axis=0)

    acc0 = jnp.zeros((SUBLANES, LANES), jnp.float32)
    if n_sub == 1:
        o_ref[...] = fold(0, acc0)
    else:
        o_ref[...] = jax.lax.fori_loop(0, n_sub, fold, acc0, unroll=min(n_sub, 8))


def rmse_loss(pred, target, *, tile_rows=None):
    """sqrt(mean((pred.squeeze() - target.squeeze())**2)) — matches torch RMSELoss.

    squeeze() only drops size-1 dims and never changes the set of elements, so the
    mean over all elements is identical; we reduce over everything.  Accumulation
    is in f32 (intended for f32 / bf16 inputs).
    """
    assert pred.size == target.size, "pred/target must have the same number of elements"
    n = pred.size

    p = jnp.ravel(pred)
    t = jnp.ravel(target)

    if n < CHUNK:
        # Tiny input: pad once up to a single (8,128) tile.  Both sides are padded
        # with zeros, so the padding contributes exactly 0 to the squared-error sum.
        p = jnp.pad(p, (0, CHUNK - n))
        t = jnp.pad(t, (0, CHUNK - n))
        n_aligned, rem = CHUNK, 0
    else:
        n_aligned = (n // CHUNK) * CHUNK
        rem = n - n_aligned

    # <1024-element ragged tail: reduce with plain jnp (avoids the jnp.pad full-copy
    # of both inputs; the kernel stays at the 2n-read HBM minimum for any n).
    tail_sum = jnp.float32(0.0)
    if rem:
        d_tail = p[n_aligned:].astype(jnp.float32) - t[n_aligned:].astype(jnp.float32)
        tail_sum = jnp.sum(d_tail * d_tail)
        p = p[:n_aligned]
        t = t[:n_aligned]

    rows = n_aligned // LANES            # always a multiple of 8
    p2 = p.reshape(rows, LANES)
    t2 = t.reshape(rows, LANES)

    # --- tile-size selection: dtype-aware (~4 MiB per input buffer), capped so the
    # parallel grid keeps >= ~8 blocks on large inputs --------------------------------
    p_item = jnp.dtype(p2.dtype).itemsize
    t_item = jnp.dtype(t2.dtype).itemsize
    if tile_rows is None:
        tile_rows = (4 << 20) // (LANES * max(p_item, t_item))   # 8192 f32, 16384 bf16
    tile_rows = max(SUBLANES, (tile_rows // SUBLANES) * SUBLANES)

    tm = min(tile_rows, rows)
    if tm > SUB_ROWS:
        tm = (tm // SUB_ROWS) * SUB_ROWS
        grid_cap = ((rows // 8) // SUB_ROWS) * SUB_ROWS          # keep >= ~8 blocks
        if grid_cap >= SUB_ROWS:
            tm = min(tm, grid_cap)
        sub = SUB_ROWS
    else:
        sub = tm                                                  # single inner fold

    grid = pl.cdiv(rows, tm)
    needs_mask = (rows % tm) != 0

    # Double-buffered input tiles + headroom for sub-tile intermediates, outputs and
    # internal scratch.  Well below v7x's 64 MiB physical VMEM; above v5e's 16 MiB
    # scoped default when the big tiles need it.
    in_tile_bytes = tm * LANES * (p_item + t_item)
    vmem_limit = min(max(2 * in_tile_bytes + (8 << 20), 16 << 20), 48 << 20)

    out_bytes = grid * SUBLANES * LANES * 4
    cost = pl.CostEstimate(
        flops=3 * n_aligned,             # sub + mul + add per element
        transcendentals=0,
        bytes_accessed=p2.size * p_item + t2.size * t_item + out_bytes,
    )

    partials = pl.pallas_call(
        functools.partial(
            _rmse_partial_kernel, valid_rows=rows, needs_mask=needs_mask, sub=sub
        ),
        out_shape=jax.ShapeDtypeStruct((grid * SUBLANES, LANES), jnp.float32),
        grid_spec=pltpu.PrefetchScalarGridSpec(
            num_scalar_prefetch=0,
            grid=(grid,),
            in_specs=[
                pl.BlockSpec((tm, LANES), lambda i: (i, 0)),
                pl.BlockSpec((tm, LANES), lambda i: (i, 0)),
            ],
            out_specs=pl.BlockSpec((SUBLANES, LANES), lambda i: (i, 0)),
        ),
        compiler_params=pltpu.CompilerParams(
            # Independent per-block partial sums -> fully parallel grid (lets both
            # TensorCores participate on v7x).
            dimension_semantics=("parallel",),
            vmem_limit_bytes=vmem_limit,
        ),
        cost_estimate=cost,
    )(p2, t2)

    # One-time cross-lane reduce, add the tail, divide by the TRUE count, sqrt.
    total = jnp.sum(partials) + tail_sum
    return jnp.sqrt(total / jnp.float32(n))


if __name__ == "__main__":
    key = jax.random.PRNGKey(0)
    k1, k2, k3, k4 = jax.random.split(key, 4)

    # NCHW-style small inputs consistent with a typical regression head output.
    pred = jax.random.normal(k1, (2, 4, 16, 16), dtype=jnp.float32)
    target = jax.random.normal(k2, (2, 4, 16, 16), dtype=jnp.float32)
    loss = jax.block_until_ready(rmse_loss(pred, target))
    ref = jnp.sqrt(jnp.mean((jnp.squeeze(pred) - jnp.squeeze(target)) ** 2))
    assert jnp.allclose(loss, ref, rtol=1e-6, atol=1e-6), (loss, ref)

    # Ragged coverage: element count not a multiple of 1024 (jnp tail path) AND a
    # grid whose last block is partial (in-kernel mask path) via a small tile_rows.
    pred2 = jax.random.normal(k3, (4, 1355), dtype=jnp.float32)    # 5420 elements
    target2 = jax.random.normal(k4, (4, 1355), dtype=jnp.float32)
    loss2 = jax.block_until_ready(rmse_loss(pred2, target2, tile_rows=16))
    ref2 = jnp.sqrt(jnp.mean((jnp.squeeze(pred2) - jnp.squeeze(target2)) ** 2))
    assert jnp.allclose(loss2, ref2, rtol=1e-5, atol=1e-6), (loss2, ref2)

    print("KERNEL_OK")
</pallas_src>

<mosaic_0001>
module attributes {stable_mosaic.version = 11 : i64} {
  func.func @_rmse_partial_kernel(%arg0: i32, %arg1: memref<16x128xf32, #tpu.memory_space<vmem>>, %arg2: memref<16x128xf32, #tpu.memory_space<vmem>>, %arg3: memref<8x128xf32, #tpu.memory_space<vmem>>) attributes {dimension_semantics = [#tpu.dimension_semantics<parallel>], iteration_bounds = array<i64: 1>, scalar_prefetch = 0 : i64, scratch_operands = 0 : i64, tpu.core_type = #tpu.core_type<tc>, window_params = [{transform_indices = @transform_0, window_bounds = array<i64: 16, 128>}, {transform_indices = @transform_1, window_bounds = array<i64: 16, 128>}, {transform_indices = @transform_2, window_bounds = array<i64: 8, 128>}]} {
    %cst = arith.constant 0.000000e+00 : f32
    %0 = vector.broadcast %cst : f32 to vector<8x128xf32>
    %c0 = arith.constant 0 : index
    %c0_0 = arith.constant 0 : index
    %1 = vector.load %arg1[%c0, %c0_0] : memref<16x128xf32, #tpu.memory_space<vmem>>, vector<16x128xf32>
    %c0_1 = arith.constant 0 : index
    %c0_2 = arith.constant 0 : index
    %2 = vector.load %arg2[%c0_1, %c0_2] : memref<16x128xf32, #tpu.memory_space<vmem>>, vector<16x128xf32>
    %3 = arith.subf %1, %2 : vector<16x128xf32>
    %4 = arith.mulf %3, %3 : vector<16x128xf32>
    %5 = vector.shape_cast %4 : vector<16x128xf32> to vector<2x8x128xf32>
    %cst_3 = arith.constant dense<0.000000e+00> : vector<8x128xf32>
    %6 = vector.multi_reduction <add>, %5, %cst_3 [0] : vector<2x8x128xf32> to vector<8x128xf32>
    %7 = arith.addf %0, %6 : vector<8x128xf32>
    %c0_4 = arith.constant 0 : index
    %c0_5 = arith.constant 0 : index
    %8 = vector.load %arg3[%c0_4, %c0_5] : memref<8x128xf32, #tpu.memory_space<vmem>>, vector<8x128xf32>
    tpu.vector_store %arg3[%c0_4, %c0_5], %7 {strides = array<i32>} : memref<8x128xf32, #tpu.memory_space<vmem>>, vector<8x128xf32>,
    return
  }
  func.func @transform_0(%arg0: i32) -> (i32, i32) {
    %c0_i32 = arith.constant 0 : i32
    %c0_i32_0 = arith.constant 0 : i32
    return %arg0, %c0_i32 : i32, i32
  }
  func.func @transform_1(%arg0: i32) -> (i32, i32) {
    %c0_i32 = arith.constant 0 : i32
    %c0_i32_0 = arith.constant 0 : i32
    return %arg0, %c0_i32 : i32, i32
  }
  func.func @transform_2(%arg0: i32) -> (i32, i32) {
    %c0_i32 = arith.constant 0 : i32
    %c0_i32_0 = arith.constant 0 : i32
    return %arg0, %c0_i32 : i32, i32
  }
}

</mosaic_0001>

<llo_original>
// kernel: tpu_custom_call.1
$region0: #{tpu_custom_call.1}
  #allocation0 [shape = 'u32[]', space=smem, size = 0x4, offset = 0x4, fixed_abs, tag = 'smem constant byte address 0x4 - core index']
  #allocation1 [shape = 'u32[72,128]{1,0:T(1,128)}', space=vmem, size = 0x9000, scoped, tag = 'internal scratch']
  %s0 = inlined_call_operand.hbm [shape: f32[16,128], index: 0, kind: input, shape index: {}]
  %s1 = inlined_call_operand.hbm [shape: f32[16,128], index: 1, kind: input, shape index: {}]
  %s2 = inlined_call_operand.hbm [shape: f32[8,128], index: 2, kind: output, shape index: {}]
  %s3 = sld [smem:[#allocation0]]
  $region26: #{tpu_custom_call.1} parent=0
    _
  %s5 = ssub.s32 1, %s3
  %s6 = scalar_select 0, %s5, %s3
  $region1: #{tpu_custom_call.1} parent=0
    #allocation2 [shape = 'u8[8192]{0}', space=vmem, size = 0x2000, scoped, tag = 'input window, operand 0, single buffered']
    #allocation3 [shape = 's32[1]{0}', space=sflag, size = 0x4, scoped, tag = 'scoped memory for tpu_custom_call.1']
    #allocation4 [shape = 's32[1]{0}', space=sflag, size = 0x4, scoped, tag = 'scoped memory for tpu_custom_call.1']
    #allocation5 [shape = 'u8[8192]{0}', space=vmem, size = 0x2000, scoped, tag = 'input window, operand 1, single buffered']
    #allocation6 [shape = 's32[1]{0}', space=sflag, size = 0x4, scoped, tag = 'scoped memory for tpu_custom_call.1']
    #allocation7 [shape = 'u8[4096]{0}', space=vmem, size = 0x1000, scoped, tag = 'output window, operand 0, single buffered']
    %7 = vsyncpa [#allocation3], 0
    %8 = vsyncpa [#allocation6], 0
    %9 = vsyncpa [#allocation4], 0
    // Predicated region
    $region2: #{tpu_custom_call.1} parent=1 // pred_check
      _
    $region3: #{tpu_custom_call.1} parent=1 // pred_check_branch
      %11 = sbr.rel (0) target = $region5
    $region4: #{tpu_custom_call.1} parent=1 // pred_region
      %13 = vsyncadd [#allocation3], 0
      %s14 = sshll.u32 %s0, 4
      %s15 = int_to_ptr.hbm [resolvable:$true] %s14
      %s16 = sshll.u32 [#allocation2], 4
      %s17 = int_to_ptr.vmem [resolvable:$true] %s16
      %22 = dma.hbm_to_vmem [thread:$0]  %s15, 256, %s17, [#allocation3], 128, 128, 8
    $region5: #{tpu_custom_call.1} parent=1 // pred_fallthru
      _
    // Predicated region
    $region6: #{tpu_custom_call.1} parent=1 // pred_check
      _
    $region7: #{tpu_custom_call.1} parent=1 // pred_check_branch
      %24 = sbr.rel (0) target = $region9
    $region8: #{tpu_custom_call.1} parent=1 // pred_region
      %26 = vsyncadd [#allocation6], 0
      %s27 = sshll.u32 %s1, 4
      %s28 = int_to_ptr.hbm [resolvable:$true] %s27
      %s29 = sshll.u32 [#allocation5], 4
      %s30 = int_to_ptr.vmem [resolvable:$true] %s29
      %35 = dma.hbm_to_vmem [thread:$0]  %s28, 256, %s30, [#allocation6], 128, 128, 8
    $region9: #{tpu_custom_call.1} parent=1 // pred_fallthru
      _
    // Predicated region
    $region10: #{tpu_custom_call.1} parent=1 // pred_check
      _
    $region11: #{tpu_custom_call.1} parent=1 // pred_check_branch
      %37 = sbr.rel (0) target = $region13
    $region12: #{tpu_custom_call.1} parent=1 // pred_region
      %39 = dma.done [#allocation3], 256
    $region13: #{tpu_custom_call.1} parent=1 // pred_fallthru
      _
    // Predicated region
    $region14: #{tpu_custom_call.1} parent=1 // pred_check
      _
    $region15: #{tpu_custom_call.1} parent=1 // pred_check_branch
      %41 = sbr.rel (0) target = $region17
    $region16: #{tpu_custom_call.1} parent=1 // pred_region
      %43 = dma.done [#allocation6], 256
    $region17: #{tpu_custom_call.1} parent=1 // pred_fallthru
      _
    %v44 = vld [vmem:[#allocation2] sm:$0xff]
    %v45 = vld [vmem:[#allocation2 + $0x8] sm:$0xff]
    %v46 = vld [vmem:[#allocation5] sm:$0xff]
    %v47 = vld [vmem:[#allocation5 + $0x8] sm:$0xff]
    %v48 = vsub.f32 %v44, %v46
    %v49 = vsub.f32 %v45, %v47
    %v50 = vmul.f32 %v48, %v48
    %v51 = vmul.f32 %v49, %v49
    %v52 = vadd.f32 %v50, %v51
    %v53 = vadd.f32 %v52, 0.0
    %54 = vst [vmem:[#allocation7] sm:$0xff] %v53
    // Predicated region
    $region18: #{tpu_custom_call.1} parent=1 // pred_check
      _
    $region19: #{tpu_custom_call.1} parent=1 // pred_check_branch
      %56 = sbr.rel (0) target = $region21
    $region20: #{tpu_custom_call.1} parent=1 // pred_region
      %58 = vsyncadd [#allocation4], 0
      %s60 = sshll.u32 [#allocation7], 4
      %s61 = int_to_ptr.vmem [resolvable:$true] %s60
      %s62 = sshll.u32 %s2, 4
      %s63 = int_to_ptr.hbm [resolvable:$true] %s62
      %65 = dma.vmem_to_hbm [thread:$0]  %s61, 128, %s63, [#allocation4]
    $region21: #{tpu_custom_call.1} parent=1 // pred_fallthru
      _
    // Predicated region
    $region22: #{tpu_custom_call.1} parent=1 // pred_check
      _
    $region23: #{tpu_custom_call.1} parent=1 // pred_check_branch
      %67 = sbr.rel (0) target = $region25
    $region24: #{tpu_custom_call.1} parent=1 // pred_region
      %69 = dma.done [#allocation4], 128
    $region25: #{tpu_custom_call.1} parent=1 // pred_fallthru
      _
    %70 = vsyncpa [#allocation3], 1
    %71 = vsyncpa [#allocation6], 1
    %72 = vsyncpa [#allocation4], 1

</llo_original>
